<compile_context>
chip_gen: v5e
topology: v5e:2x2
jax: 0.10.0
libtpu: 0.0.40
codegen_flags: <defaults>
</compile_context>

<pallas_src>
from math import log

import jax
import jax.numpy as jnp
import numpy as np
from jax.experimental import pallas as pl
from jax.experimental.pallas import tpu as pltpu

_LOG2 = float(log(2.0))


def _round_up(x, m):
    return ((x + m - 1) // m) * m


def _choose_tb(B, N, *, spin_bytes=2, vmem_budget=24 << 20):
    """Batch-tile heuristic.

    Biggest tile whose double-buffered bf16 spin stream fits a conservative
    VMEM budget (keeps v7x happy), capped at 2048 rows; batches that would
    otherwise collapse into a single grid step are split into >= 2 steps so
    dimension_semantics=("parallel",) can use both v7x TensorCores.
    """
    max_tb = max(16, (vmem_budget // (2 * max(N, 1) * spin_bytes)) // 16 * 16)
    tb = min(2048, max_tb)
    if B > 256:
        tb = min(tb, _round_up(-(-B // 2), 16))    # >= 2 grid steps
    else:
        tb = min(tb, _round_up(B, 16))             # small batch: one tile
    return max(tb, 16)


def _make_kernel(z2: bool):
    """Kernel body; z2 is a compile-time constant."""

    def kernel(s_ref, dT_ref, c_ref, out_ref):
        # s_ref  : (tb, N)  spins in {-1,+1}; bf16 (exact) or f32; batch on sublanes
        # dT_ref : (N, W)   0.5*(log_p - log_1mp)^T, f32, constant index -> resident
        # c_ref  : (1, W)   0.5*sum_n(log_p+log_1mp) + log_softmax(mix), f32
        # out_ref: (tb, 1)  per-sample log-prob
        s = s_ref[...].astype(jnp.float32)          # free VPU upcast of the bf16 stream
        q = jnp.dot(s, dT_ref[...], preferred_element_type=jnp.float32)   # (tb, W) MXU
        c = c_ref[...]
        t = q + c                                    # lp + log_mix
        if z2:
            t_inv = c - q                            # Z2 branch via lp_inv = S - lp (free)
            mx = jnp.maximum(jnp.max(t, axis=-1, keepdims=True),
                             jnp.max(t_inv, axis=-1, keepdims=True))      # (tb, 1)
            ssum = (jnp.sum(jnp.exp(t - mx), axis=-1, keepdims=True)
                    + jnp.sum(jnp.exp(t_inv - mx), axis=-1, keepdims=True))
            out_ref[...] = mx + jnp.log(ssum) - _LOG2
        else:
            mx = jnp.max(t, axis=-1, keepdims=True)
            out_ref[...] = mx + jnp.log(jnp.sum(jnp.exp(t - mx), axis=-1,
                                                keepdims=True))

    return kernel


def bernoulli_mixture_log_prob(sample, ber_weight, mix_weight, *,
                               epsilon: float, z2: bool,
                               tb=None, stream_bf16: bool = True):
    """log_prob of BernoulliMixture via a single MXU-matmul Pallas kernel.

    sample     : (B, 1, L, L) float in {-1, +1}
    ber_weight : (W, L, L)    float32
    mix_weight : (W,)         float32
    returns    : (B,)         float32
    """
    B = sample.shape[0]
    W, L, _ = ber_weight.shape
    N = L * L

    # ---- weight-side precompute, hoisted out of the kernel (tiny, once) ----
    p = jax.nn.sigmoid(ber_weight.astype(jnp.float32)).reshape(W, N)
    log_p = jnp.log(p + epsilon)
    log_1mp = jnp.log(1.0 - p + epsilon)
    d_half_T = (0.5 * (log_p - log_1mp)).T                     # (N, W)
    S = jnp.sum(log_p + log_1mp, axis=1)                       # (W,)
    mixw = mix_weight.astype(jnp.float32)
    log_mix = mixw - jax.scipy.special.logsumexp(mixw)
    c = (0.5 * S + log_mix).reshape(1, W)                      # (1, W)

    # ---- spin stream: natural (B, N) layout, no transpose / batch-pad copy --
    spins = sample.reshape(B, N)
    if stream_bf16 and jnp.dtype(spins.dtype).itemsize > 2:
        # ±1 spins are exact in bf16 -> halves the dominant HBM read. Under jit
        # the cast fuses with the sample producer; callers may also hand in
        # bf16 / int8 spins directly and skip this.
        spins = spins.astype(jnp.bfloat16)
    spin_bytes = jnp.dtype(spins.dtype).itemsize

    if tb is None:
        tb = _choose_tb(B, N, spin_bytes=spin_bytes)
    else:
        tb = max(16, _round_up(int(tb), 16))
    grid = pl.cdiv(B, tb)

    # Explicit VMEM limit: v5e's scoped default is only 16 MiB.
    spin_tile_bytes = tb * N * spin_bytes
    weight_bytes = (N * W + W) * 4
    tmp_bytes = 4 * tb * W * 4                      # matmul output + exp temporaries
    needed = 2 * spin_tile_bytes + 2 * weight_bytes + 2 * tb * 4 + tmp_bytes
    vmem_limit = int(min(64 << 20, max(32 << 20, 2 * needed)))

    out = pl.pallas_call(
        _make_kernel(z2),
        out_shape=jax.ShapeDtypeStruct((B, 1), jnp.float32),
        grid_spec=pltpu.PrefetchScalarGridSpec(
            num_scalar_prefetch=0,
            grid=(grid,),
            in_specs=[
                pl.BlockSpec((tb, N), lambda i: (i, 0)),   # streamed spin tiles
                # Constant-index weight blocks are fetched once and stay resident.
                # TODO(synk): for very large W*N, add pipeline_mode=pl.Buffered(1)
                # here to drop their unused second pipeline buffer (irrelevant at
                # W=32 / N=64, so left off to keep the lowering maximally simple).
                pl.BlockSpec((N, W), lambda i: (0, 0)),
                pl.BlockSpec((1, W), lambda i: (0, 0)),
            ],
            out_specs=pl.BlockSpec((tb, 1), lambda i: (i, 0)),
        ),
        compiler_params=pltpu.CompilerParams(
            dimension_semantics=("parallel",),
            vmem_limit_bytes=vmem_limit),
    )(spins, d_half_T, c)
    return out[:, 0]


def bernoulli_mixture_log_prob_ref(sample, ber_weight, mix_weight, *,
                                   epsilon: float, z2: bool):
    """Pure-JAX reference mirroring the PyTorch _log_prob / log_prob exactly."""
    W = ber_weight.shape[0]

    def _lp(s):
        ber_prob = jax.nn.sigmoid(ber_weight)[None, :, None, :, :]   # (1,W,1,L,L)
        mask = ((s + 1.0) / 2.0)[:, None, :, :, :]                   # (B,1,1,L,L)
        sp = ber_prob * mask + (1.0 - ber_prob) * (1.0 - mask)       # (B,W,1,L,L)
        lp = jnp.log(sp + epsilon).reshape(s.shape[0], W, -1).sum(axis=2)
        mix = jnp.exp(mix_weight)
        mix = mix / mix.sum()
        return jnp.log(jnp.exp(lp) @ mix)

    lp = _lp(sample)
    if z2:
        lp_inv = _lp(-sample)
        lp = jax.scipy.special.logsumexp(jnp.stack([lp, lp_inv]), axis=0) - log(2.0)
    return lp


if __name__ == "__main__":
    # Module hyper-parameters (small, consistent with __init__ shapes).
    L = 8            # lattice side -> N = 64 sites
    net_width = 32   # number of mixture components W
    epsilon = 1e-7

    key = jax.random.PRNGKey(0)
    k_ber, k_samp = jax.random.split(key)

    # Deterministic parameter init (same shapes as the torch module):
    #   ber_weight ~ U[0,1) of shape (W, L, L);  mix_weight = zeros(W).
    ber_weight = jax.random.uniform(k_ber, (net_width, L, L), dtype=jnp.float32)
    mix_weight = jnp.zeros((net_width,), dtype=jnp.float32)

    # Exercise both the single-tile path (B=16) and a 3-step batch grid (B=48,
    # tb=16).  Samples are ±1 spins of shape (B, 1, L, L), matching sample().
    for B, tb in ((16, None), (48, 16)):
        spins = (jax.random.bernoulli(jax.random.fold_in(k_samp, B), 0.5,
                                      (B, 1, L, L)).astype(jnp.float32) * 2.0 - 1.0)
        for z2 in (True, False):
            out = bernoulli_mixture_log_prob(spins, ber_weight, mix_weight,
                                             epsilon=epsilon, z2=z2, tb=tb)
            out = jax.block_until_ready(out)
            ref = bernoulli_mixture_log_prob_ref(spins, ber_weight, mix_weight,
                                                 epsilon=epsilon, z2=z2)
            np.testing.assert_allclose(np.asarray(out), np.asarray(ref),
                                       rtol=1e-4, atol=1e-4)

    # TODO(synk): sample() (torch.multinomial + torch.bernoulli host RNG) is
    # sampling glue, not a kernel hot path; it is not translated here.
    print("KERNEL_OK")
</pallas_src>

<mosaic_0001>
module attributes {stable_mosaic.version = 11 : i64} {
  func.func @kernel(%arg0: i32, %arg1: memref<16x64xbf16, #tpu.memory_space<vmem>>, %arg2: memref<64x32xf32, #tpu.memory_space<vmem>>, %arg3: memref<1x32xf32, #tpu.memory_space<vmem>>, %arg4: memref<16x1xf32, #tpu.memory_space<vmem>>) attributes {dimension_semantics = [#tpu.dimension_semantics<parallel>], iteration_bounds = array<i64: 1>, scalar_prefetch = 0 : i64, scratch_operands = 0 : i64, tpu.core_type = #tpu.core_type<tc>, window_params = [{transform_indices = @transform_0, window_bounds = array<i64: 16, 64>}, {pipeline_mode = #tpu.pipeline_mode<synchronous>, transform_indices = @transform_1, window_bounds = array<i64: 64, 32>}, {pipeline_mode = #tpu.pipeline_mode<synchronous>, transform_indices = @transform_2, window_bounds = array<i64: 1, 32>}, {transform_indices = @transform_3, window_bounds = array<i64: 16, 1>}]} {
    %c0 = arith.constant 0 : index
    %c0_0 = arith.constant 0 : index
    %0 = vector.load %arg1[%c0, %c0_0] : memref<16x64xbf16, #tpu.memory_space<vmem>>, vector<16x64xbf16>
    %1 = arith.extf %0 : vector<16x64xbf16> to vector<16x64xf32>
    %c0_1 = arith.constant 0 : index
    %c0_2 = arith.constant 0 : index
    %2 = vector.load %arg2[%c0_1, %c0_2] : memref<64x32xf32, #tpu.memory_space<vmem>>, vector<64x32xf32>
    %cst = arith.constant dense<0.000000e+00> : vector<16x32xf32>
    %3 = tpu.matmul %1, %2, %cst {dimension_numbers = #tpu.dot_dimension_numbers<[1], [0], [0], [1], [0, 0, 1, 1], [], []>} : vector<16x64xf32>, vector<64x32xf32>, vector<16x32xf32> -> vector<16x32xf32>
    %c0_3 = arith.constant 0 : index
    %c0_4 = arith.constant 0 : index
    %4 = vector.load %arg3[%c0_3, %c0_4] : memref<1x32xf32, #tpu.memory_space<vmem>>, vector<1x32xf32>
    %5 = vector.broadcast %4 : vector<1x32xf32> to vector<16x32xf32>
    %6 = arith.addf %3, %5 : vector<16x32xf32>
    %7 = vector.broadcast %4 : vector<1x32xf32> to vector<16x32xf32>
    %8 = arith.subf %7, %3 : vector<16x32xf32>
    %cst_5 = arith.constant dense<0xFF800000> : vector<16xf32>
    %9 = vector.multi_reduction <maximumf>, %6, %cst_5 [1] : vector<16x32xf32> to vector<16xf32>
    %10 = vector.shape_cast %9 : vector<16xf32> to vector<16x1xf32>
    %cst_6 = arith.constant dense<0xFF800000> : vector<16xf32>
    %11 = vector.multi_reduction <maximumf>, %8, %cst_6 [1] : vector<16x32xf32> to vector<16xf32>
    %12 = vector.shape_cast %11 : vector<16xf32> to vector<16x1xf32>
    %13 = arith.maximumf %10, %12 : vector<16x1xf32>
    %14 = vector.broadcast %13 : vector<16x1xf32> to vector<16x32xf32>
    %15 = arith.subf %6, %14 : vector<16x32xf32>
    %16 = math.exp %15 : vector<16x32xf32>
    %cst_7 = arith.constant dense<0.000000e+00> : vector<16xf32>
    %17 = vector.multi_reduction <add>, %16, %cst_7 [1] : vector<16x32xf32> to vector<16xf32>
    %18 = vector.shape_cast %17 : vector<16xf32> to vector<16x1xf32>
    %19 = vector.broadcast %13 : vector<16x1xf32> to vector<16x32xf32>
    %20 = arith.subf %8, %19 : vector<16x32xf32>
    %21 = math.exp %20 : vector<16x32xf32>
    %cst_8 = arith.constant dense<0.000000e+00> : vector<16xf32>
    %22 = vector.multi_reduction <add>, %21, %cst_8 [1] : vector<16x32xf32> to vector<16xf32>
    %23 = vector.shape_cast %22 : vector<16xf32> to vector<16x1xf32>
    %24 = arith.addf %18, %23 : vector<16x1xf32>
    %25 = math.log %24 : vector<16x1xf32>
    %26 = arith.addf %13, %25 : vector<16x1xf32>
    %cst_9 = arith.constant 0.693147182 : f32
    %27 = vector.broadcast %cst_9 : f32 to vector<16x1xf32>
    %28 = arith.subf %26, %27 : vector<16x1xf32>
    %c0_10 = arith.constant 0 : index
    %c0_11 = arith.constant 0 : index
    %29 = vector.load %arg4[%c0_10, %c0_11] : memref<16x1xf32, #tpu.memory_space<vmem>>, vector<16x1xf32>
    tpu.vector_store %arg4[%c0_10, %c0_11], %28 {strides = array<i32>} : memref<16x1xf32, #tpu.memory_space<vmem>>, vector<16x1xf32>,
    return
  }
  func.func @transform_0(%arg0: i32) -> (i32, i32) {
    %c0_i32 = arith.constant 0 : i32
    %c0_i32_0 = arith.constant 0 : i32
    return %arg0, %c0_i32 : i32, i32
  }
  func.func @transform_1(%arg0: i32) -> (i32, i32) {
    %c0_i32 = arith.constant 0 : i32
    %c0_i32_0 = arith.constant 0 : i32
    %c0_i32_1 = arith.constant 0 : i32
    return %c0_i32, %c0_i32_0 : i32, i32
  }
  func.func @transform_2(%arg0: i32) -> (i32, i32) {
    %c0_i32 = arith.constant 0 : i32
    %c0_i32_0 = arith.constant 0 : i32
    %c0_i32_1 = arith.constant 0 : i32
    return %c0_i32, %c0_i32_0 : i32, i32
  }
  func.func @transform_3(%arg0: i32) -> (i32, i32) {
    %c0_i32 = arith.constant 0 : i32
    %c0_i32_0 = arith.constant 0 : i32
    return %arg0, %c0_i32 : i32, i32
  }
}

</mosaic_0001>

<llo_original>
// kernel: tpu_custom_call.1
$region0: #{tpu_custom_call.1}
  #allocation0 [shape = 'u32[]', space=smem, size = 0x4, offset = 0x4, fixed_abs, tag = 'smem constant byte address 0x4 - core index']
  #allocation1 [shape = 'u32[72,128]{1,0:T(1,128)}', space=vmem, size = 0x9000, scoped, tag = 'internal scratch']
  %s0 = inlined_call_operand.vmem [shape: bf16[16,64], index: 0, kind: input, shape index: {}]
  %s1 = inlined_call_operand.vmem [shape: f32[64,32], index: 1, kind: input, shape index: {}]
  %s2 = inlined_call_operand.vmem [shape: f32[1,32], index: 2, kind: input, shape index: {}]
  %s3 = inlined_call_operand.vmem [shape: f32[16,1], index: 3, kind: output, shape index: {}]
  %s4 = sld [smem:[#allocation0]]
  $region22: #{tpu_custom_call.1} parent=0
    _
  %s6 = ssub.s32 1, %s4
  %s7 = scalar_select 0, %s6, %s4
  // Predicated region
  $region2: #{tpu_custom_call.1} parent=0 // pred_check
    _
  $region3: #{tpu_custom_call.1} parent=0 // pred_check_branch
    %9 = sbr.rel (0) target = $region5
  $region4: #{tpu_custom_call.1} parent=0 // pred_region
    _
  $region5: #{tpu_custom_call.1} parent=0 // pred_fallthru
    _
  // Predicated region
  $region6: #{tpu_custom_call.1} parent=0 // pred_check
    _
  $region7: #{tpu_custom_call.1} parent=0 // pred_check_branch
    %11 = sbr.rel (0) target = $region9
  $region8: #{tpu_custom_call.1} parent=0 // pred_region
    _
  $region9: #{tpu_custom_call.1} parent=0 // pred_fallthru
    _
  // Predicated region
  $region10: #{tpu_custom_call.1} parent=0 // pred_check
    _
  $region11: #{tpu_custom_call.1} parent=0 // pred_check_branch
    %13 = sbr.rel (0) target = $region13
  $region12: #{tpu_custom_call.1} parent=0 // pred_region
    _
  $region13: #{tpu_custom_call.1} parent=0 // pred_fallthru
    _
  %v14 = vld [vmem:[%s0] sm:$0xf]
  %v15 = vld [vmem:[%s0 + $0x4] sm:$0xf]
  %v16 = vunpack.c.l.bf16 %v14
  %v17 = vunpack.c.l.bf16 %v15
  %v18 = vld [vmem:[%s1] sm:$0xff]
  %v19 = vld [vmem:[%s1 + $0x8] sm:$0xff]
  %v20 = vld [vmem:[%s1 + $0x10] sm:$0xff]
  %v21 = vld [vmem:[%s1 + $0x18] sm:$0xff]
  %v22 = vld [vmem:[%s1 + $0x20] sm:$0xff]
  %v23 = vld [vmem:[%s1 + $0x28] sm:$0xff]
  %v24 = vld [vmem:[%s1 + $0x30] sm:$0xff]
  %v25 = vld [vmem:[%s1 + $0x38] sm:$0xff]
  %vm26 = vcmask 523264
  %v28 = vsel %vm26, %v16, 0
  %v31 = vsel %vm26, %v17, 0
  %33 = vmatpush.msra.mxu0 0.0
  %34 = vmatpush.msra.mxu0 0.0
  %35 = vmatpush.msra.mxu0 0.0
  %36 = vmatpush.msra.mxu0 0.0
  %37 = vmatpush.msra.mxu0 0.0
  %38 = vmatpush.msra.mxu0 0.0
  %39 = vmatpush.msra.mxu0 0.0
  %40 = vmatpush.msra.mxu0 0.0
  %41 = vmatpush.msra.mxu0 %v25
  %42 = vmatpush.msra.mxu0 %v24
  %43 = vmatpush.msra.mxu0 %v23
  %44 = vmatpush.msra.mxu0 %v22
  %45 = vmatpush.msra.mxu0 %v21
  %46 = vmatpush.msra.mxu0 %v20
  %47 = vmatpush.msra.mxu0 %v19
  %48 = vmatpush.msra.mxu0 %v18
  %49 = vmatmul.f32.gmra.mxu0 %v28
  %v50 = vpop.f32.mrf.mxu0
  %v51 = vadd.f32 0.0, %v50
  %52 = vmatmul.f32.gmra.mxu0 %v31
  %v53 = vpop.f32.mrf.mxu0
  %v54 = vadd.f32 0.0, %v53
  %55 = vdwg.mxu0
  %v56 = vld [vmem:[%s2] sm:$0x1]
  %v58 = vperm.slane %v56, 0
  %v60 = vadd.f32 %v51, %v58
  %v61 = vadd.f32 %v54, %v58
  %v62 = vsub.f32 %v58, %v51
  %v63 = vsub.f32 %v58, %v54
  %vm64 = vcmask 261120
  %v65 = vsel %vm64, %v60, -inf
  %66 = vmax.xlane.f32.xlu0 %v65
  %v67 = vpop.xlane.xlu0 %66
  %v68 = vsel %vm64, %v61, -inf
  %69 = vmax.xlane.f32.xlu0 %v68
  %v70 = vpop.xlane.xlu0 %69
  %v71 = vsel %vm64, %v62, -inf
  %72 = vmax.xlane.f32.xlu0 %v71
  %v73 = vpop.xlane.xlu0 %72
  %v74 = vsel %vm64, %v63, -inf
  %75 = vmax.xlane.f32.xlu0 %v74
  %v76 = vpop.xlane.xlu0 %75
  %v77 = vmax.f32 %v67, %v73
  %v78 = vmax.f32 %v70, %v76
  %v79 = vsub.f32 %v60, %v77
  %v80 = vsub.f32 %v61, %v78
  %v81 = vmul.f32 %v79, 1.442695
  %v82 = vpow.pop %v81
  %v83 = vmul.f32 %v80, 1.442695
  %v84 = vpow.pop %v83
  %v85 = vsel %vm64, %v82, 0.0
  %86 = vadd.xlane.f32.xlu0 %v85
  %v87 = vpop.xlane.xlu0 %86
  %v88 = vsel %vm64, %v84, 0.0
  %89 = vadd.xlane.f32.xlu0 %v88
  %v90 = vpop.xlane.xlu0 %89
  %v91 = vsub.f32 %v62, %v77
  %v92 = vsub.f32 %v63, %v78
  %v93 = vmul.f32 %v91, 1.442695
  %v94 = vpow.pop %v93
  %v95 = vmul.f32 %v92, 1.442695
  %v96 = vpow.pop %v95
  %v97 = vsel %vm64, %v94, 0.0
  %98 = vadd.xlane.f32.xlu0 %v97
  %v99 = vpop.xlane.xlu0 %98
  %v100 = vsel %vm64, %v96, 0.0
  %101 = vadd.xlane.f32.xlu0 %v100
  %v102 = vpop.xlane.xlu0 %101
  %v103 = vadd.f32 %v87, %v99
  %v104 = vadd.f32 %v90, %v102
  %v105 = vlog2.pop %v103
  %v106 = vmul.f32 %v105, 0.6931472
  %v107 = vlog2.pop %v104
  %v108 = vmul.f32 %v107, 0.6931472
  %v109 = vadd.f32 %v77, %v106
  %v110 = vadd.f32 %v78, %v108
  %v111 = vsub.f32 %v109, 0.6931472
  %v112 = vsub.f32 %v110, 0.6931472
  %vm113 = vcmask 7168
  %114 = vst.msk [vmem:[%s3] sm:$0xff] %vm113, %v111
  %115 = vst.msk [vmem:[%s3 + $0x8] sm:$0xff] %vm113, %v112
  // Predicated region
  $region14: #{tpu_custom_call.1} parent=0 // pred_check
    _
  $region15: #{tpu_custom_call.1} parent=0 // pred_check_branch
    %117 = sbr.rel (0) target = $region17
  $region16: #{tpu_custom_call.1} parent=0 // pred_region
    _
  $region17: #{tpu_custom_call.1} parent=0 // pred_fallthru
    _
  // Predicated region
  $region18: #{tpu_custom_call.1} parent=0 // pred_check
    _
  $region19: #{tpu_custom_call.1} parent=0 // pred_check_branch
    %119 = sbr.rel (0) target = $region21
  $region20: #{tpu_custom_call.1} parent=0 // pred_region
    _
  $region21: #{tpu_custom_call.1} parent=0 // pred_fallthru
    _

</llo_original>
